<compile_context>
chip_gen: v7x
topology: tpu7x:2x2x1
jax: 0.10.0
libtpu: 0.0.40
codegen_flags: <defaults>
</compile_context>

<pallas_src>
import functools

import jax
import jax.numpy as jnp
from jax.experimental import pallas as pl
from jax.experimental.pallas import tpu as pltpu

OUT_LANES = 128  # lane-dense packed output width (val in col 0, adv in cols 1..n_act)


def ddqn_kernel(x_ref,
                w1_ref, b1_ref, w2_ref, b2_ref,
                wh1_ref, bh1_ref, wh2_ref, bh2_ref,
                out_ref, *, inv_n_actions):
    cdt = w1_ref.dtype  # matmul operand dtype (bf16 on the perf path, f32 for checks)

    x = x_ref[...].astype(cdt)

    # trunk: Linear(state_dim,128) -> ReLU -> Linear(128,128) -> ReLU
    h = jnp.dot(x, w1_ref[...], preferred_element_type=jnp.float32) + b1_ref[...]
    h = jnp.maximum(h, 0.0)
    h = jnp.dot(h.astype(cdt), w2_ref[...], preferred_element_type=jnp.float32) + b2_ref[...]
    h = jnp.maximum(h, 0.0)

    # fused head layer 1: [val_hidden | adv_hidden] = ReLU(h @ [wv1 | wa1] + [bv1 | ba1])
    va = jnp.dot(h.astype(cdt), wh1_ref[...], preferred_element_type=jnp.float32) + bh1_ref[...]
    va = jnp.maximum(va, 0.0)

    # fused head layer 2 (block-diagonal, lane-dense 128-wide result):
    #   col 0              = val
    #   cols 1..n_actions  = adv
    #   cols n_actions+1.. = exactly 0 (zero weights & zero bias, see prep_params)
    y = jnp.dot(va.astype(cdt), wh2_ref[...], preferred_element_type=jnp.float32) + bh2_ref[...]

    val = y[:, 0:1]
    # Pad columns are exact zeros by construction, so sum(y) - val == sum(adv).
    adv_sum = jnp.sum(y, axis=-1, keepdims=True) - val
    adv_mean = adv_sum * inv_n_actions                      # mean over the REAL n_actions only

    # Dueling combine broadcast over all 128 lanes (unmasked lane-dense store).
    # NOTE: packed column 0 then holds 2*val - mean(adv); only cols 1..n_actions
    # (val + adv - mean(adv)) are meaningful and the wrapper slices them out.
    out_ref[...] = (y + val - adv_mean).astype(out_ref.dtype)


def prep_params(params, compute_dtype=jnp.bfloat16):
    """Fuse / pad the per-layer weights into the kernel's layout."""
    n_actions = params["wa2"].shape[1]
    assert n_actions + 1 <= OUT_LANES, "n_actions must fit in one 128-lane output block"
    cdt = compute_dtype

    wh1 = jnp.concatenate([params["wv1"], params["wa1"]], axis=1)          # (128, 512)
    bh1 = jnp.concatenate([params["bv1"], params["ba1"]], axis=1)          # (1, 512)

    # IMPORTANT: padding columns n_actions+1..127 of wh2/bh2 must be EXACTLY zero;
    # the kernel recovers mean(adv) as (sum(y) - y[:, 0]) / n_actions.
    wh2 = jnp.zeros((512, OUT_LANES), jnp.float32)
    wh2 = wh2.at[:256, 0:1].set(params["wv2"])                              # val head
    wh2 = wh2.at[256:, 1:1 + n_actions].set(params["wa2"])                  # adv head
    bh2 = jnp.zeros((1, OUT_LANES), jnp.float32)
    bh2 = bh2.at[:, 0:1].set(params["bv2"])
    bh2 = bh2.at[:, 1:1 + n_actions].set(params["ba2"])

    return dict(
        w1=params["w1"].astype(cdt), b1=params["b1"].astype(jnp.float32),
        w2=params["w2"].astype(cdt), b2=params["b2"].astype(jnp.float32),
        wh1=wh1.astype(cdt), bh1=bh1.astype(jnp.float32),
        wh2=wh2.astype(cdt), bh2=bh2.astype(jnp.float32),
        n_actions=n_actions,
    )


def _round_up(x, m):
    return ((x + m - 1) // m) * m


def ddqn_forward(x, fused, *, block_b=1024, out_dtype=None):
    B, state_dim = x.shape
    n_actions = fused["n_actions"]
    if out_dtype is None:
        out_dtype = fused["w1"].dtype if fused["w1"].dtype != jnp.bfloat16 else jnp.bfloat16
    # NOTE: x is NOT cast here; the kernel casts in-VMEM (avoids an extra HBM pass).

    # Batch tile: big enough to amortize the ~0.35 us per-grid-step overhead,
    # small enough to split into >= 2 grid steps so v7x's two TCs both get work.
    tb = min(block_b, max(8, _round_up(pl.cdiv(B, 2), 8)))
    grid = (pl.cdiv(B, tb),)

    weights = (fused["w1"], fused["b1"], fused["w2"], fused["b2"],
               fused["wh1"], fused["bh1"], fused["wh2"], fused["bh2"])

    def resident_spec(arr):
        # Constant block index -> stays in VMEM across all grid steps (no re-DMA);
        # Buffered(1) drops the pointless second pipeline buffer.
        return pl.BlockSpec(arr.shape, lambda i: (0, 0), pipeline_mode=pl.Buffered(1))

    in_specs = [pl.BlockSpec((tb, state_dim), lambda i: (i, 0))]
    in_specs += [resident_spec(w) for w in weights]
    out_spec = pl.BlockSpec((tb, OUT_LANES), lambda i: (i, 0))

    flops = 2 * B * (state_dim * 128 + 128 * 128 + 128 * 512 + 512 * OUT_LANES)
    bytes_accessed = (int(x.nbytes) + sum(int(w.nbytes) for w in weights)
                      + B * OUT_LANES * jnp.dtype(out_dtype).itemsize)

    kernel = functools.partial(ddqn_kernel, inv_n_actions=1.0 / n_actions)

    out = pl.pallas_call(
        kernel,
        out_shape=jax.ShapeDtypeStruct((B, OUT_LANES), out_dtype),
        grid=grid,
        in_specs=in_specs,
        out_specs=out_spec,
        compiler_params=pltpu.CompilerParams(
            dimension_semantics=("parallel",),
            vmem_limit_bytes=32 * 1024 * 1024),
        cost_estimate=pl.CostEstimate(
            flops=flops, transcendentals=0, bytes_accessed=bytes_accessed),
    )(x, *weights)

    # val + adv - mean(adv) lives in packed columns 1..n_actions (col 0 is junk).
    return out[:, 1:1 + n_actions]


def init_params(key, state_dim, n_actions):
    """Deterministic PyTorch-style uniform(-1/sqrt(fan_in), 1/sqrt(fan_in)) init."""
    def linear(key, fan_in, fan_out):
        kw, kb = jax.random.split(key)
        bound = 1.0 / jnp.sqrt(jnp.float32(fan_in))
        w = jax.random.uniform(kw, (fan_in, fan_out), jnp.float32, -bound, bound)
        b = jax.random.uniform(kb, (1, fan_out), jnp.float32, -bound, bound)
        return w, b

    keys = jax.random.split(key, 6)
    p = {}
    p["w1"], p["b1"] = linear(keys[0], state_dim, 128)
    p["w2"], p["b2"] = linear(keys[1], 128, 128)
    p["wv1"], p["bv1"] = linear(keys[2], 128, 256)
    p["wv2"], p["bv2"] = linear(keys[3], 256, 1)
    p["wa1"], p["ba1"] = linear(keys[4], 128, 256)
    p["wa2"], p["ba2"] = linear(keys[5], 256, n_actions)
    return p


def reference_forward(x, params):
    """Plain-JAX f32 reference (mirrors the PyTorch forward)."""
    h = jnp.maximum(x @ params["w1"] + params["b1"], 0.0)
    h = jnp.maximum(h @ params["w2"] + params["b2"], 0.0)
    v = jnp.maximum(h @ params["wv1"] + params["bv1"], 0.0)
    val = v @ params["wv2"] + params["bv2"]
    a = jnp.maximum(h @ params["wa1"] + params["ba1"], 0.0)
    adv = a @ params["wa2"] + params["ba2"]
    return val + adv - jnp.mean(adv, axis=1, keepdims=True)


if __name__ == "__main__":
    key = jax.random.PRNGKey(0)
    k_params, k_x = jax.random.split(key)

    batch = 2
    state_dim = 16
    n_actions = 8

    params = init_params(k_params, state_dim, n_actions)
    x = jax.random.normal(k_x, (batch, state_dim), jnp.float32)

    ref = reference_forward(x, params)

    # f32 path: the fused/padded kernel must match the reference tightly.
    out_f32 = jax.block_until_ready(
        ddqn_forward(x, prep_params(params, jnp.float32), out_dtype=jnp.float32))
    assert out_f32.shape == (batch, n_actions)
    assert jnp.allclose(out_f32, ref, atol=1e-4, rtol=1e-4), "f32 kernel mismatch vs reference"

    # bf16 matmul operands + bf16 packed output (f32 accumulation): primary perf path.
    out_bf16 = jax.block_until_ready(
        ddqn_forward(x, prep_params(params, jnp.bfloat16), out_dtype=jnp.bfloat16))
    assert out_bf16.shape == (batch, n_actions)
    assert jnp.allclose(out_bf16.astype(jnp.float32), ref, atol=3e-2, rtol=3e-2), \
        "bf16 kernel mismatch vs reference"

    print("KERNEL_OK")
</pallas_src>

<mosaic_0001>
module attributes {stable_mosaic.version = 11 : i64} {
  func.func @ddqn_kernel(%arg0: i32, %arg1: memref<8x16xf32, #tpu.memory_space<vmem>>, %arg2: memref<16x128xf32, #tpu.memory_space<vmem>>, %arg3: memref<1x128xf32, #tpu.memory_space<vmem>>, %arg4: memref<128x128xf32, #tpu.memory_space<vmem>>, %arg5: memref<1x128xf32, #tpu.memory_space<vmem>>, %arg6: memref<128x512xf32, #tpu.memory_space<vmem>>, %arg7: memref<1x512xf32, #tpu.memory_space<vmem>>, %arg8: memref<512x128xf32, #tpu.memory_space<vmem>>, %arg9: memref<1x128xf32, #tpu.memory_space<vmem>>, %arg10: memref<8x128xf32, #tpu.memory_space<vmem>>) attributes {dimension_semantics = [#tpu.dimension_semantics<parallel>], iteration_bounds = array<i64: 1>, scalar_prefetch = 0 : i64, scratch_operands = 0 : i64, tpu.core_type = #tpu.core_type<tc>, window_params = [{transform_indices = @transform_0, window_bounds = array<i64: 8, 16>}, {pipeline_mode = #tpu.pipeline_mode<synchronous>, transform_indices = @transform_1, window_bounds = array<i64: 16, 128>}, {pipeline_mode = #tpu.pipeline_mode<synchronous>, transform_indices = @transform_2, window_bounds = array<i64: 1, 128>}, {pipeline_mode = #tpu.pipeline_mode<synchronous>, transform_indices = @transform_3, window_bounds = array<i64: 128, 128>}, {pipeline_mode = #tpu.pipeline_mode<synchronous>, transform_indices = @transform_4, window_bounds = array<i64: 1, 128>}, {pipeline_mode = #tpu.pipeline_mode<synchronous>, transform_indices = @transform_5, window_bounds = array<i64: 128, 512>}, {pipeline_mode = #tpu.pipeline_mode<synchronous>, transform_indices = @transform_6, window_bounds = array<i64: 1, 512>}, {pipeline_mode = #tpu.pipeline_mode<synchronous>, transform_indices = @transform_7, window_bounds = array<i64: 512, 128>}, {pipeline_mode = #tpu.pipeline_mode<synchronous>, transform_indices = @transform_8, window_bounds = array<i64: 1, 128>}, {transform_indices = @transform_9, window_bounds = array<i64: 8, 128>}]} {
    %c0 = arith.constant 0 : index
    %c0_0 = arith.constant 0 : index
    %0 = vector.load %arg1[%c0, %c0_0] : memref<8x16xf32, #tpu.memory_space<vmem>>, vector<8x16xf32>
    %c0_1 = arith.constant 0 : index
    %c0_2 = arith.constant 0 : index
    %1 = vector.load %arg2[%c0_1, %c0_2] : memref<16x128xf32, #tpu.memory_space<vmem>>, vector<16x128xf32>
    %cst = arith.constant dense<0.000000e+00> : vector<8x128xf32>
    %2 = tpu.matmul %0, %1, %cst {dimension_numbers = #tpu.dot_dimension_numbers<[1], [0], [0], [1], [0, 0, 1, 1], [], []>} : vector<8x16xf32>, vector<16x128xf32>, vector<8x128xf32> -> vector<8x128xf32>
    %c0_3 = arith.constant 0 : index
    %c0_4 = arith.constant 0 : index
    %3 = vector.load %arg3[%c0_3, %c0_4] : memref<1x128xf32, #tpu.memory_space<vmem>>, vector<1x128xf32>
    %4 = vector.broadcast %3 : vector<1x128xf32> to vector<8x128xf32>
    %5 = arith.addf %2, %4 : vector<8x128xf32>
    %cst_5 = arith.constant 0.000000e+00 : f32
    %6 = vector.broadcast %cst_5 : f32 to vector<8x128xf32>
    %7 = arith.maximumf %5, %6 : vector<8x128xf32>
    %c0_6 = arith.constant 0 : index
    %c0_7 = arith.constant 0 : index
    %8 = vector.load %arg4[%c0_6, %c0_7] : memref<128x128xf32, #tpu.memory_space<vmem>>, vector<128x128xf32>
    %cst_8 = arith.constant dense<0.000000e+00> : vector<8x128xf32>
    %9 = tpu.matmul %7, %8, %cst_8 {dimension_numbers = #tpu.dot_dimension_numbers<[1], [0], [0], [1], [0, 0, 1, 1], [], []>} : vector<8x128xf32>, vector<128x128xf32>, vector<8x128xf32> -> vector<8x128xf32>
    %c0_9 = arith.constant 0 : index
    %c0_10 = arith.constant 0 : index
    %10 = vector.load %arg5[%c0_9, %c0_10] : memref<1x128xf32, #tpu.memory_space<vmem>>, vector<1x128xf32>
    %11 = vector.broadcast %10 : vector<1x128xf32> to vector<8x128xf32>
    %12 = arith.addf %9, %11 : vector<8x128xf32>
    %cst_11 = arith.constant 0.000000e+00 : f32
    %13 = vector.broadcast %cst_11 : f32 to vector<8x128xf32>
    %14 = arith.maximumf %12, %13 : vector<8x128xf32>
    %c0_12 = arith.constant 0 : index
    %c0_13 = arith.constant 0 : index
    %15 = vector.load %arg6[%c0_12, %c0_13] : memref<128x512xf32, #tpu.memory_space<vmem>>, vector<128x512xf32>
    %cst_14 = arith.constant dense<0.000000e+00> : vector<8x512xf32>
    %16 = tpu.matmul %14, %15, %cst_14 {dimension_numbers = #tpu.dot_dimension_numbers<[1], [0], [0], [1], [0, 0, 1, 1], [], []>} : vector<8x128xf32>, vector<128x512xf32>, vector<8x512xf32> -> vector<8x512xf32>
    %c0_15 = arith.constant 0 : index
    %c0_16 = arith.constant 0 : index
    %17 = vector.load %arg7[%c0_15, %c0_16] : memref<1x512xf32, #tpu.memory_space<vmem>>, vector<1x512xf32>
    %18 = vector.broadcast %17 : vector<1x512xf32> to vector<8x512xf32>
    %19 = arith.addf %16, %18 : vector<8x512xf32>
    %cst_17 = arith.constant 0.000000e+00 : f32
    %20 = vector.broadcast %cst_17 : f32 to vector<8x512xf32>
    %21 = arith.maximumf %19, %20 : vector<8x512xf32>
    %c0_18 = arith.constant 0 : index
    %c0_19 = arith.constant 0 : index
    %22 = vector.load %arg8[%c0_18, %c0_19] : memref<512x128xf32, #tpu.memory_space<vmem>>, vector<512x128xf32>
    %cst_20 = arith.constant dense<0.000000e+00> : vector<8x128xf32>
    %23 = tpu.matmul %21, %22, %cst_20 {dimension_numbers = #tpu.dot_dimension_numbers<[1], [0], [0], [1], [0, 0, 1, 1], [], []>} : vector<8x512xf32>, vector<512x128xf32>, vector<8x128xf32> -> vector<8x128xf32>
    %c0_21 = arith.constant 0 : index
    %c0_22 = arith.constant 0 : index
    %24 = vector.load %arg9[%c0_21, %c0_22] : memref<1x128xf32, #tpu.memory_space<vmem>>, vector<1x128xf32>
    %25 = vector.broadcast %24 : vector<1x128xf32> to vector<8x128xf32>
    %26 = arith.addf %23, %25 : vector<8x128xf32>
    %27 = vector.extract_strided_slice %26 {offsets = [0, 0], sizes = [8, 1], strides = [1, 1]} : vector<8x128xf32> to vector<8x1xf32>
    %cst_23 = arith.constant dense<0.000000e+00> : vector<8xf32>
    %28 = vector.multi_reduction <add>, %26, %cst_23 [1] : vector<8x128xf32> to vector<8xf32>
    %29 = vector.shape_cast %28 : vector<8xf32> to vector<8x1xf32>
    %30 = arith.subf %29, %27 : vector<8x1xf32>
    %cst_24 = arith.constant 1.250000e-01 : f32
    %31 = vector.broadcast %cst_24 : f32 to vector<8x1xf32>
    %32 = arith.mulf %30, %31 : vector<8x1xf32>
    %33 = vector.broadcast %27 : vector<8x1xf32> to vector<8x128xf32>
    %34 = arith.addf %26, %33 : vector<8x128xf32>
    %35 = vector.broadcast %32 : vector<8x1xf32> to vector<8x128xf32>
    %36 = arith.subf %34, %35 : vector<8x128xf32>
    %c0_25 = arith.constant 0 : index
    %c0_26 = arith.constant 0 : index
    %37 = vector.load %arg10[%c0_25, %c0_26] : memref<8x128xf32, #tpu.memory_space<vmem>>, vector<8x128xf32>
    tpu.vector_store %arg10[%c0_25, %c0_26], %36 {strides = array<i32>} : memref<8x128xf32, #tpu.memory_space<vmem>>, vector<8x128xf32>,
    return
  }
  func.func @transform_0(%arg0: i32) -> (i32, i32) {
    %c0_i32 = arith.constant 0 : i32
    %c0_i32_0 = arith.constant 0 : i32
    return %arg0, %c0_i32 : i32, i32
  }
  func.func @transform_1(%arg0: i32) -> (i32, i32) {
    %c0_i32 = arith.constant 0 : i32
    %c0_i32_0 = arith.constant 0 : i32
    %c0_i32_1 = arith.constant 0 : i32
    return %c0_i32, %c0_i32_0 : i32, i32
  }
  func.func @transform_2(%arg0: i32) -> (i32, i32) {
    %c0_i32 = arith.constant 0 : i32
    %c0_i32_0 = arith.constant 0 : i32
    %c0_i32_1 = arith.constant 0 : i32
    return %c0_i32, %c0_i32_0 : i32, i32
  }
  func.func @transform_3(%arg0: i32) -> (i32, i32) {
    %c0_i32 = arith.constant 0 : i32
    %c0_i32_0 = arith.constant 0 : i32
    %c0_i32_1 = arith.constant 0 : i32
    return %c0_i32, %c0_i32_0 : i32, i32
  }
  func.func @transform_4(%arg0: i32) -> (i32, i32) {
    %c0_i32 = arith.constant 0 : i32
    %c0_i32_0 = arith.constant 0 : i32
    %c0_i32_1 = arith.constant 0 : i32
    return %c0_i32, %c0_i32_0 : i32, i32
  }
  func.func @transform_5(%arg0: i32) -> (i32, i32) {
    %c0_i32 = arith.constant 0 : i32
    %c0_i32_0 = arith.constant 0 : i32
    %c0_i32_1 = arith.constant 0 : i32
    return %c0_i32, %c0_i32_0 : i32, i32
  }
  func.func @transform_6(%arg0: i32) -> (i32, i32) {
    %c0_i32 = arith.constant 0 : i32
    %c0_i32_0 = arith.constant 0 : i32
    %c0_i32_1 = arith.constant 0 : i32
    return %c0_i32, %c0_i32_0 : i32, i32
  }
  func.func @transform_7(%arg0: i32) -> (i32, i32) {
    %c0_i32 = arith.constant 0 : i32
    %c0_i32_0 = arith.constant 0 : i32
    %c0_i32_1 = arith.constant 0 : i32
    return %c0_i32, %c0_i32_0 : i32, i32
  }
  func.func @transform_8(%arg0: i32) -> (i32, i32) {
    %c0_i32 = arith.constant 0 : i32
    %c0_i32_0 = arith.constant 0 : i32
    %c0_i32_1 = arith.constant 0 : i32
    return %c0_i32, %c0_i32_0 : i32, i32
  }
  func.func @transform_9(%arg0: i32) -> (i32, i32) {
    %c0_i32 = arith.constant 0 : i32
    %c0_i32_0 = arith.constant 0 : i32
    return %arg0, %c0_i32 : i32, i32
  }
}

</mosaic_0001>

<llo_original>
// kernel: tpu_custom_call.1
$region0: #{tpu_custom_call.1}
  #allocation0 [shape = 'u32[]', space=smem, size = 0x4, offset = 0x4, fixed_abs, tag = 'smem constant byte address 0x4 - core index']
  #allocation1 [shape = 'u32[144,128]{1,0:T(1,128)}', space=vmem, size = 0x12000, scoped, tag = 'internal scratch']
  %s0 = inlined_call_operand.hbm [shape: f32[2,16], index: 0, kind: input, shape index: {}]
  %s1 = inlined_call_operand.hbm [shape: f32[16,128], index: 1, kind: input, shape index: {}]
  %s2 = inlined_call_operand.vmem [shape: f32[1,128], index: 2, kind: input, shape index: {}]
  %s3 = inlined_call_operand.hbm [shape: f32[128,128], index: 3, kind: input, shape index: {}]
  %s4 = inlined_call_operand.vmem [shape: f32[1,128], index: 4, kind: input, shape index: {}]
  %s5 = inlined_call_operand.hbm [shape: f32[128,512], index: 5, kind: input, shape index: {}]
  %s6 = inlined_call_operand.vmem [shape: f32[1,512], index: 6, kind: input, shape index: {}]
  %s7 = inlined_call_operand.hbm [shape: f32[512,128], index: 7, kind: input, shape index: {}]
  %s8 = inlined_call_operand.vmem [shape: f32[1,128], index: 8, kind: input, shape index: {}]
  %s9 = inlined_call_operand.hbm [shape: f32[2,128], index: 9, kind: output, shape index: {}]
  %s10 = sld [smem:[#allocation0]]
  $region66: #{tpu_custom_call.1} parent=0
    _
  %s12 = ssub.s32 1, %s10
  %s13 = scalar_select 0, %s12, %s10
  $region1: #{tpu_custom_call.1} parent=0
    #allocation2 [shape = 'u8[4096]{0}', space=vmem, size = 0x1000, scoped, tag = 'input window, operand 0, single buffered']
    #allocation3 [shape = 's32[1]{0}', space=sflag, size = 0x4, scoped, tag = 'scoped memory for tpu_custom_call.1']
    #allocation4 [shape = 's32[1]{0}', space=sflag, size = 0x4, scoped, tag = 'scoped memory for tpu_custom_call.1']
    #allocation5 [shape = 'u8[8192]{0}', space=vmem, size = 0x2000, scoped, tag = 'input window, operand 1, single buffered']
    #allocation6 [shape = 's32[1]{0}', space=sflag, size = 0x4, scoped, tag = 'scoped memory for tpu_custom_call.1']
    #allocation7 [shape = 'u8[65536]{0}', space=vmem, size = 0x10000, scoped, tag = 'input window, operand 3, single buffered']
    #allocation8 [shape = 'u8[262144]{0}', space=vmem, size = 0x40000, scoped, tag = 'input window, operand 5, single buffered']
    #allocation9 [shape = 's32[1]{0}', space=sflag, size = 0x4, scoped, tag = 'scoped memory for tpu_custom_call.1']
    #allocation10 [shape = 'u8[262144]{0}', space=vmem, size = 0x40000, scoped, tag = 'input window, operand 7, single buffered']
    #allocation11 [shape = 'u8[4096]{0}', space=vmem, size = 0x1000, scoped, tag = 'output window, operand 0, single buffered']
    %14 = vsyncpa [#allocation3], 0
    %15 = vsyncpa [#allocation6], 0
    %16 = vsyncpa [#allocation9], 0
    %17 = vsyncpa [#allocation4], 0
    // Predicated region
    $region2: #{tpu_custom_call.1} parent=1 // pred_check
      _
    $region3: #{tpu_custom_call.1} parent=1 // pred_check_branch
      %19 = sbr.rel (0) target = $region5
    $region4: #{tpu_custom_call.1} parent=1 // pred_region
      %s21 = ssub.s32 128, 32
      %22 = vsyncadd [#allocation3], %s21
      %s23 = sshll.u32 [#allocation2], 4
      %s24 = int_to_ptr.vmem [resolvable:$true] %s23
      %29 = dma.hbm_to_vmem [thread:$0]  %s0, 32, %s24, [#allocation3], 32, 32, 2
    $region5: #{tpu_custom_call.1} parent=1 // pred_fallthru
      _
    // Predicated region
    $region6: #{tpu_custom_call.1} parent=1 // pred_check
      _
    $region7: #{tpu_custom_call.1} parent=1 // pred_check_branch
      %31 = sbr.rel (0) target = $region9
    $region8: #{tpu_custom_call.1} parent=1 // pred_region
      %s33 = ssub.s32 256, 256
      %34 = vsyncadd [#allocation6], %s33
      %s35 = sshll.u32 [#allocation5], 4
      %s36 = int_to_ptr.vmem [resolvable:$true] %s35
      %41 = dma.hbm_to_vmem [thread:$0]  %s1, 256, %s36, [#allocation6], 128, 128, 8
    $region9: #{tpu_custom_call.1} parent=1 // pred_fallthru
      _
    // Predicated region
    $region10: #{tpu_custom_call.1} parent=1 // pred_check
      _
    $region11: #{tpu_custom_call.1} parent=1 // pred_check_branch
      %43 = sbr.rel (0) target = $region13
    $region12: #{tpu_custom_call.1} parent=1 // pred_region
      _
    $region13: #{tpu_custom_call.1} parent=1 // pred_fallthru
      _
    // Predicated region
    $region14: #{tpu_custom_call.1} parent=1 // pred_check
      _
    $region15: #{tpu_custom_call.1} parent=1 // pred_check_branch
      %45 = sbr.rel (0) target = $region17
    $region16: #{tpu_custom_call.1} parent=1 // pred_region
      %s47 = ssub.s32 2048, 2048
      %48 = vsyncadd [#allocation6], %s47
      %s49 = sshll.u32 [#allocation7], 4
      %s50 = int_to_ptr.vmem [resolvable:$true] %s49
      %55 = dma.hbm_to_vmem [thread:$0]  %s3, 2048, %s50, [#allocation6], 128, 128, 8
    $region17: #{tpu_custom_call.1} parent=1 // pred_fallthru
      _
    // Predicated region
    $region18: #{tpu_custom_call.1} parent=1 // pred_check
      _
    $region19: #{tpu_custom_call.1} parent=1 // pred_check_branch
      %57 = sbr.rel (0) target = $region21
    $region20: #{tpu_custom_call.1} parent=1 // pred_region
      _
    $region21: #{tpu_custom_call.1} parent=1 // pred_fallthru
      _
    // Predicated region
    $region22: #{tpu_custom_call.1} parent=1 // pred_check
      _
    $region23: #{tpu_custom_call.1} parent=1 // pred_check_branch
      %59 = sbr.rel (0) target = $region25
    $region24: #{tpu_custom_call.1} parent=1 // pred_region
      %s61 = ssub.s32 8192, 8192
      %62 = vsyncadd [#allocation9], %s61
      %s63 = sshll.u32 [#allocation8], 4
      %s64 = int_to_ptr.vmem [resolvable:$true] %s63
      %69 = dma.hbm_to_vmem [thread:$0]  %s5, 8192, %s64, [#allocation9], 512, 512, 32
    $region25: #{tpu_custom_call.1} parent=1 // pred_fallthru
      _
    // Predicated region
    $region26: #{tpu_custom_call.1} parent=1 // pred_check
      _
    $region27: #{tpu_custom_call.1} parent=1 // pred_check_branch
      %71 = sbr.rel (0) target = $region29
    $region28: #{tpu_custom_call.1} parent=1 // pred_region
      _
    $region29: #{tpu_custom_call.1} parent=1 // pred_fallthru
      _
    // Predicated region
    $region30: #{tpu_custom_call.1} parent=1 // pred_check
      _
    $region31: #{tpu_custom_call.1} parent=1 // pred_check_branch
      %73 = sbr.rel (0) target = $region33
    $region32: #{tpu_custom_call.1} parent=1 // pred_region
      %s75 = ssub.s32 8192, 8192
      %76 = vsyncadd [#allocation9], %s75
      %s77 = sshll.u32 [#allocation10], 4
      %s78 = int_to_ptr.vmem [resolvable:$true] %s77
      %83 = dma.hbm_to_vmem [thread:$0]  %s7, 8192, %s78, [#allocation9], 128, 128, 8
    $region33: #{tpu_custom_call.1} parent=1 // pred_fallthru
      _
    // Predicated region
    $region34: #{tpu_custom_call.1} parent=1 // pred_check
      _
    $region35: #{tpu_custom_call.1} parent=1 // pred_check_branch
      %85 = sbr.rel (0) target = $region37
    $region36: #{tpu_custom_call.1} parent=1 // pred_region
      _
    $region37: #{tpu_custom_call.1} parent=1 // pred_fallthru
      _
    // Predicated region
    $region38: #{tpu_custom_call.1} parent=1 // pred_check
      _
    $region39: #{tpu_custom_call.1} parent=1 // pred_check_branch
      %87 = sbr.rel (0) target = $region41
    $region40: #{tpu_custom_call.1} parent=1 // pred_region
      %88 = dma.done [#allocation3], 128
    $region41: #{tpu_custom_call.1} parent=1 // pred_fallthru
      _
    // Predicated region
    $region42: #{tpu_custom_call.1} parent=1 // pred_check
      _
    $region43: #{tpu_custom_call.1} parent=1 // pred_check_branch
      %90 = sbr.rel (0) target = $region45
    $region44: #{tpu_custom_call.1} parent=1 // pred_region
      %91 = dma.done [#allocation6], 256
    $region45: #{tpu_custom_call.1} parent=1 // pred_fallthru
      _
    // Predicated region
    $region46: #{tpu_custom_call.1} parent=1 // pred_check
      _
    $region47: #{tpu_custom_call.1} parent=1 // pred_check_branch
      %93 = sbr.rel (0) target = $region49
    $region48: #{tpu_custom_call.1} parent=1 // pred_region
      %94 = dma.done [#allocation6], 2048
    $region49: #{tpu_custom_call.1} parent=1 // pred_fallthru
      _
    // Predicated region
    $region50: #{tpu_custom_call.1} parent=1 // pred_check
      _
    $region51: #{tpu_custom_call.1} parent=1 // pred_check_branch
      %96 = sbr.rel (0) target = $region53
    $region52: #{tpu_custom_call.1} parent=1 // pred_region
      %97 = dma.done [#allocation9], 8192
    $region53: #{tpu_custom_call.1} parent=1 // pred_fallthru
      _
    // Predicated region
    $region54: #{tpu_custom_call.1} parent=1 // pred_check
      _
    $region55: #{tpu_custom_call.1} parent=1 // pred_check_branch
      %99 = sbr.rel (0) target = $region57
    $region56: #{tpu_custom_call.1} parent=1 // pred_region
      %100 = dma.done [#allocation9], 8192
    $region57: #{tpu_custom_call.1} parent=1 // pred_fallthru
      _
    %v101 = vld [vmem:[#allocation2] sm:$0xff]
    %v102 = vld [vmem:[#allocation5] sm:$0xff]
    %v103 = vld [vmem:[#allocation5 + $0x8] sm:$0xff]
    %v104 = vld [vmem:[%s2] sm:$0x1]
    %v106 = vlaneseq
    %v107 = vshrl.u32 %v106, 7
    %v108 = vsub.s32 0, %v107
    %v109 = vrot.slane %v104, %v108
    %vm111 = vcmask 130048
    %v113 = vsel %vm111, %v101, 0
    %115 = vmatprep.subr.mxu0 0.0
    %116 = vmatpush1.msra.mxu0 %v102
    %117 = vmatprep.subr.mxu0 0.0
    %118 = vmatpush1.msra.mxu0 %v103
    %119 = vmatprep.subr.mxu0 0.0
    %120 = vmatpush1.msra.mxu0 0.0
    %121 = vmatprep.subr.mxu0 0.0
    %122 = vmatpush1.msra.mxu0 0.0
    %123 = vmatprep.subr.mxu0 0.0
    %124 = vmatpush1.msra.mxu0 0.0
    %125 = vmatprep.subr.mxu0 0.0
    %126 = vmatpush1.msra.mxu0 0.0
    %127 = vmatprep.subr.mxu0 0.0
    %128 = vmatpush1.msra.mxu0 0.0
    %129 = vmatprep.subr.mxu0 0.0
    %130 = vmatpush1.msra.mxu0 0.0
    %131 = vmatprep.subr.mxu0 0.0
    %132 = vmatpush1.msra.mxu0 0.0
    %133 = vmatprep.subr.mxu0 0.0
    %134 = vmatpush1.msra.mxu0 0.0
    %135 = vmatprep.subr.mxu0 0.0
    %136 = vmatpush1.msra.mxu0 0.0
    %137 = vmatprep.subr.mxu0 0.0
    %138 = vmatpush1.msra.mxu0 0.0
    %139 = vmatprep.subr.mxu0 0.0
    %140 = vmatpush1.msra.mxu0 0.0
    %141 = vmatprep.subr.mxu0 0.0
    %142 = vmatpush1.msra.mxu0 0.0
    %143 = vmatprep.subr.mxu0 0.0
    %144 = vmatpush1.msra.mxu0 0.0
    %145 = vmatprep.subr.mxu0 0.0
    %146 = vmatpush1.msra.mxu0 0.0
    %147 = vmatprep.subr.mxu0 0.0
    %148 = vmatpush1.msra.mxu0 0.0
    %149 = vmatprep.subr.mxu0 0.0
    %150 = vmatpush1.msra.mxu0 0.0
    %151 = vmatprep.subr.mxu0 0.0
    %152 = vmatpush1.msra.mxu0 0.0
    %153 = vmatprep.subr.mxu0 0.0
    %154 = vmatpush1.msra.mxu0 0.0
    %155 = vmatprep.subr.mxu0 0.0
    %156 = vmatpush1.msra.mxu0 0.0
    %157 = vmatprep.subr.mxu0 0.0
    %158 = vmatpush1.msra.mxu0 0.0
    %159 = vmatprep.subr.mxu0 0.0
    %160 = vmatpush1.msra.mxu0 0.0
    %161 = vmatprep.subr.mxu0 0.0
    %162 = vmatpush1.msra.mxu0 0.0
    %163 = vmatprep.subr.mxu0 0.0
    %164 = vmatpush1.msra.mxu0 0.0
    %165 = vmatprep.subr.mxu0 0.0
    %166 = vmatpush1.msra.mxu0 0.0
    %167 = vmatprep.subr.mxu0 0.0
    %168 = vmatpush1.msra.mxu0 0.0
    %169 = vmatprep.subr.mxu0 0.0
    %170 = vmatpush1.msra.mxu0 0.0
    %171 = vmatprep.subr.mxu0 0.0
    %172 = vmatpush1.msra.mxu0 0.0
    %173 = vmatprep.subr.mxu0 0.0
    %174 = vmatpush1.msra.mxu0 0.0
    %175 = vmatprep.subr.mxu0 0.0
    %176 = vmatpush1.msra.mxu0 0.0
    %177 = vmatprep.subr.mxu0 0.0
    %178 = vmatpush1.msra.mxu0 0.0
    %179 = vmatprep.mubr.f32.mxu0 0.0
    %180 = vmatmul.mubr.f32.gmra.mrb[0].mxu0 %v113
    %v181 = vpop.f32.mrb[0].mxu0
    %v182 = vadd.f32 %v109, %v181
    %v183 = vpop.f32.mrb[0].mxu0
    %184 = vdwg.mxu0
    %v185 = vmax.f32 %v182, 0.0
    %v186 = vld [vmem:[#allocation7] sm:$0xff]
    %v187 = vld [vmem:[#allocation7 + $0x8] sm:$0xff]
    %v188 = vld [vmem:[#allocation7 + $0x10] sm:$0xff]
    %v189 = vld [vmem:[#allocation7 + $0x18] sm:$0xff]
    %v190 = vld [vmem:[#allocation7 + $0x20] sm:$0xff]
    %v191 = vld [vmem:[#allocation7 + $0x28] sm:$0xff]
    %v192 = vld [vmem:[#allocation7 + $0x30] sm:$0xff]
    %v193 = vld [vmem:[#allocation7 + $0x38] sm:$0xff]
    %v194 = vld [vmem:[#allocation7 + $0x40] sm:$0xff]
    %v195 = vld [vmem:[#allocation7 + $0x48] sm:$0xff]
    %v196 = vld [vmem:[#allocation7 + $0x50] sm:$0xff]
    %v197 = vld [vmem:[#allocation7 + $0x58] sm:$0xff]
    %v198 = vld [vmem:[#allocation7 + $0x60] sm:$0xff]
    %v199 = vld [vmem:[#allocation7 + $0x68] sm:$0xff]
    %v200 = vld [vmem:[#allocation7 + $0x70] sm:$0xff]
    %v201 = vld [vmem:[#allocation7 + $0x78] sm:$0xff]
    %v202 = vld [vmem:[%s4] sm:$0x1]
    %v204 = vlaneseq
    %v205 = vshrl.u32 %v204, 7
    %v206 = vsub.s32 0, %v205
    %v207 = vrot.slane %v202, %v206
    %209 = vmatprep.subr.mxu0 0.0
    %210 = vmatpush1.msra.mxu0 %v186
    %211 = vmatprep.subr.mxu0 0.0
    %212 = vmatpush1.msra.mxu0 %v187
    %213 = vmatprep.subr.mxu0 0.0
    %214 = vmatpush1.msra.mxu0 %v188
    %215 = vmatprep.subr.mxu0 0.0
    %216 = vmatpush1.msra.mxu0 %v189
    %217 = vmatprep.subr.mxu0 0.0
    %218 = vmatpush1.msra.mxu0 %v190
    %219 = vmatprep.subr.mxu0 0.0
    %220 = vmatpush1.msra.mxu0 %v191
    %221 = vmatprep.subr.mxu0 0.0
    %222 = vmatpush1.msra.mxu0 %v192
    %223 = vmatprep.subr.mxu0 0.0
    %224 = vmatpush1.msra.mxu0 %v193
    %225 = vmatprep.subr.mxu0 0.0
    %226 = vmatpush1.msra.mxu0 %v194
    %227 = vmatprep.subr.mxu0 0.0
    %228 = vmatpush1.msra.mxu0 %v195
    %229 = vmatprep.subr.mxu0 0.0
    %230 = vmatpush1.msra.mxu0 %v196
    %231 = vmatprep.subr.mxu0 0.0
    %232 = vmatpush1.msra.mxu0 %v197
    %233 = vmatprep.subr.mxu0 0.0
    %234 = vmatpush1.msra.mxu0 %v198
    %235 = vmatprep.subr.mxu0 0.0
    %236 = vmatpush1.msra.mxu0 %v199
    %237 = vmatprep.subr.mxu0 0.0
    %238 = vmatpush1.msra.mxu0 %v200
    %239 = vmatprep.subr.mxu0 0.0
    %240 = vmatpush1.msra.mxu0 %v201
    %241 = vmatprep.subr.mxu0 0.0
    %242 = vmatpush1.msra.mxu0 0.0
    %243 = vmatprep.subr.mxu0 0.0
    %244 = vmatpush1.msra.mxu0 0.0
    %245 = vmatprep.subr.mxu0 0.0
    %246 = vmatpush1.msra.mxu0 0.0
    %247 = vmatprep.subr.mxu0 0.0
    %248 = vmatpush1.msra.mxu0 0.0
    %249 = vmatprep.subr.mxu0 0.0
    %250 = vmatpush1.msra.mxu0 0.0
    %251 = vmatprep.subr.mxu0 0.0
    %252 = vmatpush1.msra.mxu0 0.0
    %253 = vmatprep.subr.mxu0 0.0
    %254 = vmatpush1.msra.mxu0 0.0
    %255 = vmatprep.subr.mxu0 0.0
    %256 = vmatpush1.msra.mxu0 0.0
    %257 = vmatprep.subr.mxu0 0.0
    %258 = vmatpush1.msra.mxu0 0.0
    %259 = vmatprep.subr.mxu0 0.0
    %260 = vmatpush1.msra.mxu0 0.0
    %261 = vmatprep.subr.mxu0 0.0
    %262 = vmatpush1.msra.mxu0 0.0
    %263 = vmatprep.subr.mxu0 0.0
    %264 = vmatpush1.msra.mxu0 0.0
    %265 = vmatprep.subr.mxu0 0.0
    %266 = vmatpush1.msra.mxu0 0.0
    %267 = vmatprep.subr.mxu0 0.0
    %268 = vmatpush1.msra.mxu0 0.0
    %269 = vmatprep.subr.mxu0 0.0
    %270 = vmatpush1.msra.mxu0 0.0
    %271 = vmatprep.subr.mxu0 0.0
    %272 = vmatpush1.msra.mxu0 0.0
    %273 = vmatprep.mubr.f32.mxu0 0.0
    %274 = vmatmul.mubr.f32.gmra.mrb[0].mxu0 %v185
    %v275 = vpop.f32.mrb[0].mxu0
    %v276 = vadd.f32 %v207, %v275
    %v277 = vpop.f32.mrb[0].mxu0
    %278 = vdwg.mxu0
    %v279 = vmax.f32 %v276, 0.0
    %v280 = vld [vmem:[#allocation8] sm:$0xff]
    %v281 = vld [vmem:[#allocation8 + $0x8] sm:$0xff]
    %v282 = vld [vmem:[#allocation8 + $0x10] sm:$0xff]
    %v283 = vld [vmem:[#allocation8 + $0x18] sm:$0xff]
    %v284 = vld [vmem:[#allocation8 + $0x20] sm:$0xff]
    %v285 = vld [vmem:[#allocation8 + $0x28] sm:$0xff]
    %v286 = vld [vmem:[#allocation8 + $0x30] sm:$0xff]
    %v287 = vld [vmem:[#allocation8 + $0x38] sm:$0xff]
    %v288 = vld [vmem:[#allocation8 + $0x40] sm:$0xff]
    %v289 = vld [vmem:[#allocation8 + $0x48] sm:$0xff]
    %v290 = vld [vmem:[#allocation8 + $0x50] sm:$0xff]
    %v291 = vld [vmem:[#allocation8 + $0x58] sm:$0xff]
    %v292 = vld [vmem:[#allocation8 + $0x60] sm:$0xff]
    %v293 = vld [vmem:[#allocation8 + $0x68] sm:$0xff]
    %v294 = vld [vmem:[#allocation8 + $0x70] sm:$0xff]
    %v295 = vld [vmem:[#allocation8 + $0x78] sm:$0xff]
    %v296 = vld [vmem:[#allocation8 + $0x80] sm:$0xff]
    %v297 = vld [vmem:[#allocation8 + $0x88] sm:$0xff]
    %v298 = vld [vmem:[#allocation8 + $0x90] sm:$0xff]
    %v299 = vld [vmem:[#allocation8 + $0x98] sm:$0xff]
    %v300 = vld [vmem:[#allocation8 + $0xa0] sm:$0xff]
    %v301 = vld [vmem:[#allocation8 + $0xa8] sm:$0xff]
    %v302 = vld [vmem:[#allocation8 + $0xb0] sm:$0xff]
    %v303 = vld [vmem:[#allocation8 + $0xb8] sm:$0xff]
    %v304 = vld [vmem:[#allocation8 + $0xc0] sm:$0xff]
    %v305 = vld [vmem:[#allocation8 + $0xc8] sm:$0xff]
    %v306 = vld [vmem:[#allocation8 + $0xd0] sm:$0xff]
    %v307 = vld [vmem:[#allocation8 + $0xd8] sm:$0xff]
    %v308 = vld [vmem:[#allocation8 + $0xe0] sm:$0xff]
    %v309 = vld [vmem:[#allocation8 + $0xe8] sm:$0xff]
    %v310 = vld [vmem:[#allocation8 + $0xf0] sm:$0xff]
    %v311 = vld [vmem:[#allocation8 + $0xf8] sm:$0xff]
    %v312 = vld [vmem:[#allocation8 + $0x100] sm:$0xff]
    %v313 = vld [vmem:[#allocation8 + $0x108] sm:$0xff]
    %v314 = vld [vmem:[#allocation8 + $0x110] sm:$0xff]
    %v315 = vld [vmem:[#allocation8 + $0x118] sm:$0xff]
    %v316 = vld [vmem:[#allocation8 + $0x120] sm:$0xff]
    %v317 = vld [vmem:[#allocation8 + $0x128] sm:$0xff]
    %v318 = vld [vmem:[#allocation8 + $0x130] sm:$0xff]
    %v319 = vld [vmem:[#allocation8 + $0x138] sm:$0xff]
    %v320 = vld [vmem:[#allocation8 + $0x140] sm:$0xff]
    %v321 = vld [vmem:[#allocation8 + $0x148] sm:$0xff]
    %v322 = vld [vmem:[#allocation8 + $0x150] sm:$0xff]
    %v323 = vld [vmem:[#allocation8 + $0x158] sm:$0xff]
    %v324 = vld [vmem:[#allocation8 + $0x160] sm:$0xff]
    %v325 = vld [vmem:[#allocation8 + $0x168] sm:$0xff]
    %v326 = vld [vmem:[#allocation8 + $0x170] sm:$0xff]
    %v327 = vld [vmem:[#allocation8 + $0x178] sm:$0xff]
    %v328 = vld [vmem:[#allocation8 + $0x180] sm:$0xff]
    %v329 = vld [vmem:[#allocation8 + $0x188] sm:$0xff]
    %v330 = vld [vmem:[#allocation8 + $0x190] sm:$0xff]
    %v331 = vld [vmem:[#allocation8 + $0x198] sm:$0xff]
    %v332 = vld [vmem:[#allocation8 + $0x1a0] sm:$0xff]
    %v333 = vld [vmem:[#allocation8 + $0x1a8] sm:$0xff]
    %v334 = vld [vmem:[#allocation8 + $0x1b0] sm:$0xff]
    %v335 = vld [vmem:[#allocation8 + $0x1b8] sm:$0xff]
    %v336 = vld [vmem:[#allocation8 + $0x1c0] sm:$0xff]
    %v337 = vld [vmem:[#allocation8 + $0x1c8] sm:$0xff]
    %v338 = vld [vmem:[#allocation8 + $0x1d0] sm:$0xff]
    %v339 = vld [vmem:[#allocation8 + $0x1d8] sm:$0xff]
    %v340 = vld [vmem:[#allocation8 + $0x1e0] sm:$0xff]
    %v341 = vld [vmem:[#allocation8 + $0x1e8] sm:$0xff]
    %v342 = vld [vmem:[#allocation8 + $0x1f0] sm:$0xff]
    %v343 = vld [vmem:[#allocation8 + $0x1f8] sm:$0xff]
    %v344 = vld [vmem:[%s6] sm:$0xf]
    %v346 = vlaneseq
    %v347 = vshrl.u32 %v346, 7
    %v348 = vsub.s32 0, %v347
    %v349 = vrot.slane %v344, %v348
    %v350 = vlaneseq
    %v351 = vshrl.u32 %v350, 7
    %v352 = vsub.s32 1, %v351
    %v353 = vrot.slane %v344, %v352
    %v354 = vlaneseq
    %v355 = vshrl.u32 %v354, 7
    %v356 = vsub.s32 2, %v355
    %v357 = vrot.slane %v344, %v356
    %v358 = vlaneseq
    %v359 = vshrl.u32 %v358, 7
    %v360 = vsub.s32 3, %v359
    %v361 = vrot.slane %v344, %v360
    %366 = vmatprep.subr.mxu0 %v281
    %367 = vmatpush1.msra.mxu0 %v280
    %368 = vmatprep.subr.mxu0 %v285
    %369 = vmatpush1.msra.mxu0 %v284
    %370 = vmatprep.subr.mxu0 %v289
    %371 = vmatpush1.msra.mxu0 %v288
    %372 = vmatprep.subr.mxu0 %v293
    %373 = vmatpush1.msra.mxu0 %v292
    %374 = vmatprep.subr.mxu0 %v297
    %375 = vmatpush1.msra.mxu0 %v296
    %376 = vmatprep.subr.mxu0 %v301
    %377 = vmatpush1.msra.mxu0 %v300
    %378 = vmatprep.subr.mxu0 %v305
    %379 = vmatpush1.msra.mxu0 %v304
    %380 = vmatprep.subr.mxu0 %v309
    %381 = vmatpush1.msra.mxu0 %v308
    %382 = vmatprep.subr.mxu0 %v313
    %383 = vmatpush1.msra.mxu0 %v312
    %384 = vmatprep.subr.mxu0 %v317
    %385 = vmatpush1.msra.mxu0 %v316
    %386 = vmatprep.subr.mxu0 %v321
    %387 = vmatpush1.msra.mxu0 %v320
    %388 = vmatprep.subr.mxu0 %v325
    %389 = vmatpush1.msra.mxu0 %v324
    %390 = vmatprep.subr.mxu0 %v329
    %391 = vmatpush1.msra.mxu0 %v328
    %392 = vmatprep.subr.mxu0 %v333
    %393 = vmatpush1.msra.mxu0 %v332
    %394 = vmatprep.subr.mxu0 %v337
    %395 = vmatpush1.msra.mxu0 %v336
    %396 = vmatprep.subr.mxu0 %v341
    %397 = vmatpush1.msra.mxu0 %v340
    %398 = vmatprep.subr.mxu0 0.0
    %399 = vmatpush1.msra.mxu0 0.0
    %400 = vmatprep.subr.mxu0 0.0
    %401 = vmatpush1.msra.mxu0 0.0
    %402 = vmatprep.subr.mxu0 0.0
    %403 = vmatpush1.msra.mxu0 0.0
    %404 = vmatprep.subr.mxu0 0.0
    %405 = vmatpush1.msra.mxu0 0.0
    %406 = vmatprep.subr.mxu0 0.0
    %407 = vmatpush1.msra.mxu0 0.0
    %408 = vmatprep.subr.mxu0 0.0
    %409 = vmatpush1.msra.mxu0 0.0
    %410 = vmatprep.subr.mxu0 0.0
    %411 = vmatpush1.msra.mxu0 0.0
    %412 = vmatprep.subr.mxu0 0.0
    %413 = vmatpush1.msra.mxu0 0.0
    %414 = vmatprep.subr.mxu0 0.0
    %415 = vmatpush1.msra.mxu0 0.0
    %416 = vmatprep.subr.mxu0 0.0
    %417 = vmatpush1.msra.mxu0 0.0
    %418 = vmatprep.subr.mxu0 0.0
    %419 = vmatpush1.msra.mxu0 0.0
    %420 = vmatprep.subr.mxu0 0.0
    %421 = vmatpush1.msra.mxu0 0.0
    %422 = vmatprep.subr.mxu0 0.0
    %423 = vmatpush1.msra.mxu0 0.0
    %424 = vmatprep.subr.mxu0 0.0
    %425 = vmatpush1.msra.mxu0 0.0
    %426 = vmatprep.subr.mxu0 0.0
    %427 = vmatpush1.msra.mxu0 0.0
    %428 = vmatprep.subr.mxu0 0.0
    %429 = vmatpush1.msra.mxu0 0.0
    %430 = vmatprep.mubr.f32.mxu0 0.0
    %431 = vmatmul.mubr.f32.gmra.mrb[0].mxu0 %v279
    %v432 = vpop.f32.mrb[0].mxu0
    %v433 = vadd.f32 %v349, %v432
    %v434 = vpop.f32.mrb[0].mxu0
    %v435 = vadd.f32 %v353, %v434
    %436 = vdwg.mxu0
    %437 = vmatprep.subr.mxu0 %v283
    %438 = vmatpush1.msra.mxu0 %v282
    %439 = vmatprep.subr.mxu0 %v287
    %440 = vmatpush1.msra.mxu0 %v286
    %441 = vmatprep.subr.mxu0 %v291
    %442 = vmatpush1.msra.mxu0 %v290
    %443 = vmatprep.subr.mxu0 %v295
    %444 = vmatpush1.msra.mxu0 %v294
    %445 = vmatprep.subr.mxu0 %v299
    %446 = vmatpush1.msra.mxu0 %v298
    %447 = vmatprep.subr.mxu0 %v303
    %448 = vmatpush1.msra.mxu0 %v302
    %449 = vmatprep.subr.mxu0 %v307
    %450 = vmatpush1.msra.mxu0 %v306
    %451 = vmatprep.subr.mxu0 %v311
    %452 = vmatpush1.msra.mxu0 %v310
    %453 = vmatprep.subr.mxu0 %v315
    %454 = vmatpush1.msra.mxu0 %v314
    %455 = vmatprep.subr.mxu0 %v319
    %456 = vmatpush1.msra.mxu0 %v318
    %457 = vmatprep.subr.mxu0 %v323
    %458 = vmatpush1.msra.mxu0 %v322
    %459 = vmatprep.subr.mxu0 %v327
    %460 = vmatpush1.msra.mxu0 %v326
    %461 = vmatprep.subr.mxu0 %v331
    %462 = vmatpush1.msra.mxu0 %v330
    %463 = vmatprep.subr.mxu0 %v335
    %464 = vmatpush1.msra.mxu0 %v334
    %465 = vmatprep.subr.mxu0 %v339
    %466 = vmatpush1.msra.mxu0 %v338
    %467 = vmatprep.subr.mxu0 %v343
    %468 = vmatpush1.msra.mxu0 %v342
    %469 = vmatprep.subr.mxu0 0.0
    %470 = vmatpush1.msra.mxu0 0.0
    %471 = vmatprep.subr.mxu0 0.0
    %472 = vmatpush1.msra.mxu0 0.0
    %473 = vmatprep.subr.mxu0 0.0
    %474 = vmatpush1.msra.mxu0 0.0
    %475 = vmatprep.subr.mxu0 0.0
    %476 = vmatpush1.msra.mxu0 0.0
    %477 = vmatprep.subr.mxu0 0.0
    %478 = vmatpush1.msra.mxu0 0.0
    %479 = vmatprep.subr.mxu0 0.0
    %480 = vmatpush1.msra.mxu0 0.0
    %481 = vmatprep.subr.mxu0 0.0
    %482 = vmatpush1.msra.mxu0 0.0
    %483 = vmatprep.subr.mxu0 0.0
    %484 = vmatpush1.msra.mxu0 0.0
    %485 = vmatprep.subr.mxu0 0.0
    %486 = vmatpush1.msra.mxu0 0.0
    %487 = vmatprep.subr.mxu0 0.0
    %488 = vmatpush1.msra.mxu0 0.0
    %489 = vmatprep.subr.mxu0 0.0
    %490 = vmatpush1.msra.mxu0 0.0
    %491 = vmatprep.subr.mxu0 0.0
    %492 = vmatpush1.msra.mxu0 0.0
    %493 = vmatprep.subr.mxu0 0.0
    %494 = vmatpush1.msra.mxu0 0.0
    %495 = vmatprep.subr.mxu0 0.0
    %496 = vmatpush1.msra.mxu0 0.0
    %497 = vmatprep.subr.mxu0 0.0
    %498 = vmatpush1.msra.mxu0 0.0
    %499 = vmatprep.subr.mxu0 0.0
    %500 = vmatpush1.msra.mxu0 0.0
    %501 = vmatprep.mubr.f32.mxu0 0.0
    %502 = vmatmul.mubr.f32.gmra.mrb[0].mxu0 %v279
    %v503 = vpop.f32.mrb[0].mxu0
    %v504 = vadd.f32 %v357, %v503
    %v505 = vpop.f32.mrb[0].mxu0
    %v506 = vadd.f32 %v361, %v505
    %507 = vdwg.mxu0
    %v508 = vmax.f32 %v433, 0.0
    %v509 = vmax.f32 %v435, 0.0
    %v510 = vmax.f32 %v504, 0.0
    %v511 = vmax.f32 %v506, 0.0
    %v512 = vld [vmem:[#allocation10] sm:$0xff]
    %v513 = vld [vmem:[#allocation10 + $0x8] sm:$0xff]
    %v514 = vld [vmem:[#allocation10 + $0x10] sm:$0xff]
    %v515 = vld [vmem:[#allocation10 + $0x18] sm:$0xff]
    %v516 = vld [vmem:[#allocation10 + $0x20] sm:$0xff]
    %v517 = vld [vmem:[#allocation10 + $0x28] sm:$0xff]
    %v518 = vld [vmem:[#allocation10 + $0x30] sm:$0xff]
    %v519 = vld [vmem:[#allocation10 + $0x38] sm:$0xff]
    %v520 = vld [vmem:[#allocation10 + $0x40] sm:$0xff]
    %v521 = vld [vmem:[#allocation10 + $0x48] sm:$0xff]
    %v522 = vld [vmem:[#allocation10 + $0x50] sm:$0xff]
    %v523 = vld [vmem:[#allocation10 + $0x58] sm:$0xff]
    %v524 = vld [vmem:[#allocation10 + $0x60] sm:$0xff]
    %v525 = vld [vmem:[#allocation10 + $0x68] sm:$0xff]
    %v526 = vld [vmem:[#allocation10 + $0x70] sm:$0xff]
    %v527 = vld [vmem:[#allocation10 + $0x78] sm:$0xff]
    %v528 = vld [vmem:[#allocation10 + $0x80] sm:$0xff]
    %v529 = vld [vmem:[#allocation10 + $0x88] sm:$0xff]
    %v530 = vld [vmem:[#allocation10 + $0x90] sm:$0xff]
    %v531 = vld [vmem:[#allocation10 + $0x98] sm:$0xff]
    %v532 = vld [vmem:[#allocation10 + $0xa0] sm:$0xff]
    %v533 = vld [vmem:[#allocation10 + $0xa8] sm:$0xff]
    %v534 = vld [vmem:[#allocation10 + $0xb0] sm:$0xff]
    %v535 = vld [vmem:[#allocation10 + $0xb8] sm:$0xff]
    %v536 = vld [vmem:[#allocation10 + $0xc0] sm:$0xff]
    %v537 = vld [vmem:[#allocation10 + $0xc8] sm:$0xff]
    %v538 = vld [vmem:[#allocation10 + $0xd0] sm:$0xff]
    %v539 = vld [vmem:[#allocation10 + $0xd8] sm:$0xff]
    %v540 = vld [vmem:[#allocation10 + $0xe0] sm:$0xff]
    %v541 = vld [vmem:[#allocation10 + $0xe8] sm:$0xff]
    %v542 = vld [vmem:[#allocation10 + $0xf0] sm:$0xff]
    %v543 = vld [vmem:[#allocation10 + $0xf8] sm:$0xff]
    %v544 = vld [vmem:[#allocation10 + $0x100] sm:$0xff]
    %v545 = vld [vmem:[#allocation10 + $0x108] sm:$0xff]
    %v546 = vld [vmem:[#allocation10 + $0x110] sm:$0xff]
    %v547 = vld [vmem:[#allocation10 + $0x118] sm:$0xff]
    %v548 = vld [vmem:[#allocation10 + $0x120] sm:$0xff]
    %v549 = vld [vmem:[#allocation10 + $0x128] sm:$0xff]
    %v550 = vld [vmem:[#allocation10 + $0x130] sm:$0xff]
    %v551 = vld [vmem:[#allocation10 + $0x138] sm:$0xff]
    %v552 = vld [vmem:[#allocation10 + $0x140] sm:$0xff]
    %v553 = vld [vmem:[#allocation10 + $0x148] sm:$0xff]
    %v554 = vld [vmem:[#allocation10 + $0x150] sm:$0xff]
    %v555 = vld [vmem:[#allocation10 + $0x158] sm:$0xff]
    %v556 = vld [vmem:[#allocation10 + $0x160] sm:$0xff]
    %v557 = vld [vmem:[#allocation10 + $0x168] sm:$0xff]
    %v558 = vld [vmem:[#allocation10 + $0x170] sm:$0xff]
    %v559 = vld [vmem:[#allocation10 + $0x178] sm:$0xff]
    %v560 = vld [vmem:[#allocation10 + $0x180] sm:$0xff]
    %v561 = vld [vmem:[#allocation10 + $0x188] sm:$0xff]
    %v562 = vld [vmem:[#allocation10 + $0x190] sm:$0xff]
    %v563 = vld [vmem:[#allocation10 + $0x198] sm:$0xff]
    %v564 = vld [vmem:[#allocation10 + $0x1a0] sm:$0xff]
    %v565 = vld [vmem:[#allocation10 + $0x1a8] sm:$0xff]
    %v566 = vld [vmem:[#allocation10 + $0x1b0] sm:$0xff]
    %v567 = vld [vmem:[#allocation10 + $0x1b8] sm:$0xff]
    %v568 = vld [vmem:[#allocation10 + $0x1c0] sm:$0xff]
    %v569 = vld [vmem:[#allocation10 + $0x1c8] sm:$0xff]
    %v570 = vld [vmem:[#allocation10 + $0x1d0] sm:$0xff]
    %v571 = vld [vmem:[#allocation10 + $0x1d8] sm:$0xff]
    %v572 = vld [vmem:[#allocation10 + $0x1e0] sm:$0xff]
    %v573 = vld [vmem:[#allocation10 + $0x1e8] sm:$0xff]
    %v574 = vld [vmem:[#allocation10 + $0x1f0] sm:$0xff]
    %v575 = vld [vmem:[#allocation10 + $0x1f8] sm:$0xff]
    %v576 = vld [vmem:[%s8] sm:$0x1]
    %v578 = vlaneseq
    %v579 = vshrl.u32 %v578, 7
    %v580 = vsub.s32 0, %v579
    %v581 = vrot.slane %v576, %v580
    %583 = vmatprep.subr.mxu0 0.0
    %584 = vmatpush1.msra.mxu0 %v512
    %585 = vmatprep.subr.mxu0 0.0
    %586 = vmatpush1.msra.mxu0 %v513
    %587 = vmatprep.subr.mxu0 0.0
    %588 = vmatpush1.msra.mxu0 %v514
    %589 = vmatprep.subr.mxu0 0.0
    %590 = vmatpush1.msra.mxu0 %v515
    %591 = vmatprep.subr.mxu0 0.0
    %592 = vmatpush1.msra.mxu0 %v516
    %593 = vmatprep.subr.mxu0 0.0
    %594 = vmatpush1.msra.mxu0 %v517
    %595 = vmatprep.subr.mxu0 0.0
    %596 = vmatpush1.msra.mxu0 %v518
    %597 = vmatprep.subr.mxu0 0.0
    %598 = vmatpush1.msra.mxu0 %v519
    %599 = vmatprep.subr.mxu0 0.0
    %600 = vmatpush1.msra.mxu0 %v520
    %601 = vmatprep.subr.mxu0 0.0
    %602 = vmatpush1.msra.mxu0 %v521
    %603 = vmatprep.subr.mxu0 0.0
    %604 = vmatpush1.msra.mxu0 %v522
    %605 = vmatprep.subr.mxu0 0.0
    %606 = vmatpush1.msra.mxu0 %v523
    %607 = vmatprep.subr.mxu0 0.0
    %608 = vmatpush1.msra.mxu0 %v524
    %609 = vmatprep.subr.mxu0 0.0
    %610 = vmatpush1.msra.mxu0 %v525
    %611 = vmatprep.subr.mxu0 0.0
    %612 = vmatpush1.msra.mxu0 %v526
    %613 = vmatprep.subr.mxu0 0.0
    %614 = vmatpush1.msra.mxu0 %v527
    %615 = vmatprep.subr.mxu0 0.0
    %616 = vmatpush1.msra.mxu0 %v528
    %617 = vmatprep.subr.mxu0 0.0
    %618 = vmatpush1.msra.mxu0 %v529
    %619 = vmatprep.subr.mxu0 0.0
    %620 = vmatpush1.msra.mxu0 %v530
    %621 = vmatprep.subr.mxu0 0.0
    %622 = vmatpush1.msra.mxu0 %v531
    %623 = vmatprep.subr.mxu0 0.0
    %624 = vmatpush1.msra.mxu0 %v532
    %625 = vmatprep.subr.mxu0 0.0
    %626 = vmatpush1.msra.mxu0 %v533
    %627 = vmatprep.subr.mxu0 0.0
    %628 = vmatpush1.msra.mxu0 %v534
    %629 = vmatprep.subr.mxu0 0.0
    %630 = vmatpush1.msra.mxu0 %v535
    %631 = vmatprep.subr.mxu0 0.0
    %632 = vmatpush1.msra.mxu0 %v536
    %633 = vmatprep.subr.mxu0 0.0
    %634 = vmatpush1.msra.mxu0 %v537
    %635 = vmatprep.subr.mxu0 0.0
    %636 = vmatpush1.msra.mxu0 %v538
    %637 = vmatprep.subr.mxu0 0.0
    %638 = vmatpush1.msra.mxu0 %v539
    %639 = vmatprep.subr.mxu0 0.0
    %640 = vmatpush1.msra.mxu0 %v540
    %641 = vmatprep.subr.mxu0 0.0
    %642 = vmatpush1.msra.mxu0 %v541
    %643 = vmatprep.subr.mxu0 0.0
    %644 = vmatpush1.msra.mxu0 %v542
    %645 = vmatprep.subr.mxu0 0.0
    %646 = vmatpush1.msra.mxu0 %v543
    %647 = vmatprep.mubr.f32.mxu0 %v509
    %648 = vmatmul.mubr.f32.gmra.mrb[0].mxu0 %v508
    %v649 = vpop.f32.mrb[0].mxu0
    %v650 = vadd.f32 %v581, %v649
    %v651 = vpop.f32.mrb[0].mxu0
    %652 = vdwg.mxu0
    %653 = vmatprep.subr.mxu0 0.0
    %654 = vmatpush1.msra.mxu0 %v544
    %655 = vmatprep.subr.mxu0 0.0
    %656 = vmatpush1.msra.mxu0 %v545
    %657 = vmatprep.subr.mxu0 0.0
    %658 = vmatpush1.msra.mxu0 %v546
    %659 = vmatprep.subr.mxu0 0.0
    %660 = vmatpush1.msra.mxu0 %v547
    %661 = vmatprep.subr.mxu0 0.0
    %662 = vmatpush1.msra.mxu0 %v548
    %663 = vmatprep.subr.mxu0 0.0
    %664 = vmatpush1.msra.mxu0 %v549
    %665 = vmatprep.subr.mxu0 0.0
    %666 = vmatpush1.msra.mxu0 %v550
    %667 = vmatprep.subr.mxu0 0.0
    %668 = vmatpush1.msra.mxu0 %v551
    %669 = vmatprep.subr.mxu0 0.0
    %670 = vmatpush1.msra.mxu0 %v552
    %671 = vmatprep.subr.mxu0 0.0
    %672 = vmatpush1.msra.mxu0 %v553
    %673 = vmatprep.subr.mxu0 0.0
    %674 = vmatpush1.msra.mxu0 %v554
    %675 = vmatprep.subr.mxu0 0.0
    %676 = vmatpush1.msra.mxu0 %v555
    %677 = vmatprep.subr.mxu0 0.0
    %678 = vmatpush1.msra.mxu0 %v556
    %679 = vmatprep.subr.mxu0 0.0
    %680 = vmatpush1.msra.mxu0 %v557
    %681 = vmatprep.subr.mxu0 0.0
    %682 = vmatpush1.msra.mxu0 %v558
    %683 = vmatprep.subr.mxu0 0.0
    %684 = vmatpush1.msra.mxu0 %v559
    %685 = vmatprep.subr.mxu0 0.0
    %686 = vmatpush1.msra.mxu0 %v560
    %687 = vmatprep.subr.mxu0 0.0
    %688 = vmatpush1.msra.mxu0 %v561
    %689 = vmatprep.subr.mxu0 0.0
    %690 = vmatpush1.msra.mxu0 %v562
    %691 = vmatprep.subr.mxu0 0.0
    %692 = vmatpush1.msra.mxu0 %v563
    %693 = vmatprep.subr.mxu0 0.0
    %694 = vmatpush1.msra.mxu0 %v564
    %695 = vmatprep.subr.mxu0 0.0
    %696 = vmatpush1.msra.mxu0 %v565
    %697 = vmatprep.subr.mxu0 0.0
    %698 = vmatpush1.msra.mxu0 %v566
    %699 = vmatprep.subr.mxu0 0.0
    %700 = vmatpush1.msra.mxu0 %v567
    %701 = vmatprep.subr.mxu0 0.0
    %702 = vmatpush1.msra.mxu0 %v568
    %703 = vmatprep.subr.mxu0 0.0
    %704 = vmatpush1.msra.mxu0 %v569
    %705 = vmatprep.subr.mxu0 0.0
    %706 = vmatpush1.msra.mxu0 %v570
    %707 = vmatprep.subr.mxu0 0.0
    %708 = vmatpush1.msra.mxu0 %v571
    %709 = vmatprep.subr.mxu0 0.0
    %710 = vmatpush1.msra.mxu0 %v572
    %711 = vmatprep.subr.mxu0 0.0
    %712 = vmatpush1.msra.mxu0 %v573
    %713 = vmatprep.subr.mxu0 0.0
    %714 = vmatpush1.msra.mxu0 %v574
    %715 = vmatprep.subr.mxu0 0.0
    %716 = vmatpush1.msra.mxu0 %v575
    %717 = vmatprep.mubr.f32.mxu0 %v511
    %718 = vmatmul.mubr.f32.gmra.mrb[0].mxu0 %v510
    %v719 = vpop.f32.mrb[0].mxu0
    %v720 = vadd.f32 %v650, %v719
    %v721 = vpop.f32.mrb[0].mxu0
    %722 = vdwg.mxu0
    %723 = vadd.xlane.f32.xlu0 %v720
    %v724 = vpop.xlane.xlu0 %723
    %v725 = vsub.f32 %v724, %v720
    %v726 = vmul.f32 %v725, 0.125
    %728 = vset.pattern.permute.xlu0 0
    %729 = vperm.xlu0 %728, %v720
    %v730 = vpop.permute.xlu0 %729
    %v732 = vadd.f32 %v720, %v730
    %734 = vset.pattern.permute.xlu0 0
    %735 = vperm.xlu0 %734, %v726
    %v736 = vpop.permute.xlu0 %735
    %v738 = vsub.f32 %v732, %v736
    %739 = vst [vmem:[#allocation11] sm:$0xff] %v738
    // Predicated region
    $region58: #{tpu_custom_call.1} parent=1 // pred_check
      _
    $region59: #{tpu_custom_call.1} parent=1 // pred_check_branch
      %741 = sbr.rel (0) target = $region61
    $region60: #{tpu_custom_call.1} parent=1 // pred_region
      %s743 = ssub.s32 128, 32
      %744 = vsyncadd [#allocation4], %s743
      %s745 = sshll.u32 [#allocation11], 4
      %s746 = int_to_ptr.vmem [resolvable:$true] %s745
      %751 = dma.vmem_to_hbm [thread:$0]  %s746, 32, %s9, [#allocation4], 32, 32, 2
    $region61: #{tpu_custom_call.1} parent=1 // pred_fallthru
      _
    // Predicated region
    $region62: #{tpu_custom_call.1} parent=1 // pred_check
      _
    $region63: #{tpu_custom_call.1} parent=1 // pred_check_branch
      %753 = sbr.rel (0) target = $region65
    $region64: #{tpu_custom_call.1} parent=1 // pred_region
      %754 = dma.done [#allocation4], 128
    $region65: #{tpu_custom_call.1} parent=1 // pred_fallthru
      _
    %755 = vsyncpa [#allocation3], 1
    %756 = vsyncpa [#allocation6], 1
    %757 = vsyncpa [#allocation9], 1
    %758 = vsyncpa [#allocation4], 1

</llo_original>
